<compile_context>
chip_gen: v5e
topology: v5e:2x2
jax: 0.10.0
libtpu: 0.0.40
codegen_flags: <defaults>
</compile_context>

<pallas_src>
import jax
import jax.numpy as jnp
from jax.experimental import pallas as pl
from jax.experimental.pallas import tpu as pltpu

LANES = 128
SUBLANES = 8
TARGET_TILE_BYTES = 4 << 20      # per-input tile size goal (4 MiB)
NUM_SPLITS = 2                   # leading "parallel" axis (both TCs on v7x)
FALLBACK_ELEMS = 1 << 16         # below this, plain XLA reduce is cheaper
VMEM_LIMIT_BYTES = 48 << 20      # fits 16 MiB of pipelined buffers everywhere


def _l1_partial_kernel(a_ref, b_ref, out_ref):
    # grid = (splits, tiles_per_split); axis 1 is the sequential reduction.
    # a_ref/b_ref: (tile_rows, LANES) input tiles (native dtype, upcast here).
    # out_ref:     (SUBLANES, LANES) per-split partial sums.  Its block index
    # is constant along grid axis 1, so the tile stays VMEM-resident across
    # the whole reduction -> accumulate into it directly (no scratch needed).
    i = pl.program_id(1)

    @pl.when(i == 0)
    def _():
        out_ref[...] = jnp.zeros_like(out_ref)

    a = a_ref[...].astype(jnp.float32)
    b = b_ref[...].astype(jnp.float32)
    absdiff = jnp.abs(a - b)
    # Fold (tile_rows, 128) -> (8, 128) vreg-shaped partials.  The reshape
    # matches the native (8,128) tiling, so this lowers to pure VPU adds
    # (no cross-lane reduction, no materialized copy) inside the loop.
    out_ref[...] += jnp.sum(absdiff.reshape(-1, SUBLANES, LANES), axis=0)


@jax.jit
def l1_loss(a: jax.Array, b: jax.Array) -> jax.Array:
    """Equivalent of nn.L1Loss()(a, b) == mean(|a - b|), computed in f32."""
    assert a.shape == b.shape, (a.shape, b.shape)
    n = a.size
    if n == 0:
        return jnp.float32(0.0)

    # Tiny tensors / no lane-aligned view: a single grid step of pure launch
    # overhead would dominate -> plain XLA reduce.
    if n % LANES != 0 or n < FALLBACK_ELEMS or (n // LANES) < SUBLANES:
        return jnp.mean(jnp.abs(a.astype(jnp.float32) - b.astype(jnp.float32)))

    lane_rows = n // LANES
    # Free row-major reshape (no pad, no slice, no dtype copy).
    a2d = a.reshape(lane_rows, LANES)
    b2d = b.reshape(lane_rows, LANES)

    # Split the row range across TensorCores (v7x), tile each split's range.
    splits = NUM_SPLITS if lane_rows >= NUM_SPLITS * SUBLANES else 1
    rows_per_split = lane_rows // splits

    # Size the tile by bytes (bf16 inputs get 2x the rows of f32).
    itemsize = max(a.dtype.itemsize, b.dtype.itemsize)
    max_tile_rows = max(
        SUBLANES,
        (TARGET_TILE_BYTES // (LANES * itemsize)) // SUBLANES * SUBLANES,
    )
    tiles_per_split = pl.cdiv(rows_per_split, max_tile_rows)
    tile_rows = max(SUBLANES,
                    (rows_per_split // tiles_per_split) // SUBLANES * SUBLANES)
    main_rows = splits * tiles_per_split * tile_rows  # rows covered by grid

    def in_index_map(s, i):
        return (s * tiles_per_split + i, 0)

    partials = pl.pallas_call(
        _l1_partial_kernel,
        out_shape=jax.ShapeDtypeStruct((splits * SUBLANES, LANES), jnp.float32),
        grid_spec=pltpu.PrefetchScalarGridSpec(
            num_scalar_prefetch=0,
            grid=(splits, tiles_per_split),
            in_specs=[
                pl.BlockSpec((tile_rows, LANES), in_index_map),
                pl.BlockSpec((tile_rows, LANES), in_index_map),
            ],
            out_specs=pl.BlockSpec((SUBLANES, LANES), lambda s, i: (s, 0)),
        ),
        compiler_params=pltpu.CompilerParams(
            dimension_semantics=("parallel", "arbitrary"),
            vmem_limit_bytes=VMEM_LIMIT_BYTES,
        ),
    )(a2d, b2d)

    total = jnp.sum(partials)

    if main_rows < lane_rows:
        # Tiny uncovered tail (< splits * tile_rows rows): plain XLA reduce.
        ta = a2d[main_rows:].astype(jnp.float32)
        tb = b2d[main_rows:].astype(jnp.float32)
        total = total + jnp.sum(jnp.abs(ta - tb))

    return (total / jnp.float32(n)).astype(jnp.float32)


def perceptual_loss(inp: jax.Array, tgt: jax.Array) -> jax.Array:
    """PerceptualLoss.forward, restricted to the self-contained pixel term.

    The original module adds VGG19 / VGG-Face feature-space L1 terms and a
    multi-scale bilinear pyramid; those need pretrained weights downloaded
    from the network and cannot be reproduced in a self-contained script.
    """
    loss = l1_loss(inp, tgt)
    # TODO(synk): VGG19 / VGG-Face feature L1 terms and the n_scale bilinear
    # pyramid require pretrained weights (model_zoo download); each such term
    # would reuse l1_loss() above (ideally batched into one pallas_call with
    # scalar-prefetched per-term row offsets to amortize launch overhead).
    return loss


if __name__ == "__main__":
    key = jax.random.PRNGKey(0)
    k1, k2, k3, k4 = jax.random.split(key, 4)

    # Image-like inputs (B, C, H, W) consistent with the module, sized so the
    # Pallas kernel path (>= 64K elements) is exercised.
    x = jax.random.uniform(k1, (2, 3, 128, 128), dtype=jnp.float32)
    y = jax.random.uniform(k2, (2, 3, 128, 128), dtype=jnp.float32)

    loss = perceptual_loss(x, y)
    jax.block_until_ready(loss)
    ref = jnp.mean(jnp.abs(x - y))
    assert jnp.allclose(loss, ref, rtol=1e-5, atol=1e-6), (loss, ref)

    # Also exercise the bf16 path (byte-sized tiling -> 2x rows per tile).
    xb = jax.random.uniform(k3, (2, 3, 256, 256), dtype=jnp.float32).astype(jnp.bfloat16)
    yb = jax.random.uniform(k4, (2, 3, 256, 256), dtype=jnp.float32).astype(jnp.bfloat16)
    loss_b = l1_loss(xb, yb)
    jax.block_until_ready(loss_b)
    ref_b = jnp.mean(jnp.abs(xb.astype(jnp.float32) - yb.astype(jnp.float32)))
    assert jnp.allclose(loss_b, ref_b, rtol=1e-4, atol=1e-6), (loss_b, ref_b)

    print("KERNEL_OK")
</pallas_src>

<mosaic_0001>
module attributes {stable_mosaic.version = 11 : i64} {
  func.func @_l1_partial_kernel(%arg0: i32, %arg1: i32, %arg2: memref<384x128xf32, #tpu.memory_space<vmem>>, %arg3: memref<384x128xf32, #tpu.memory_space<vmem>>, %arg4: memref<8x128xf32, #tpu.memory_space<vmem>>) attributes {dimension_semantics = [#tpu.dimension_semantics<parallel>, #tpu.dimension_semantics<arbitrary>], iteration_bounds = array<i64: 2, 1>, scalar_prefetch = 0 : i64, scratch_operands = 0 : i64, tpu.core_type = #tpu.core_type<tc>, window_params = [{transform_indices = @transform_0, window_bounds = array<i64: 384, 128>}, {transform_indices = @transform_1, window_bounds = array<i64: 384, 128>}, {transform_indices = @transform_2, window_bounds = array<i64: 8, 128>}]} {
    %c0_i32 = arith.constant 0 : i32
    %0 = arith.cmpi eq, %arg1, %c0_i32 : i32
    %1 = arith.extui %0 : i1 to i32
    %c0_i32_0 = arith.constant 0 : i32
    %2 = arith.cmpi ne, %1, %c0_i32_0 : i32
    scf.if %2 {
      %cst_8 = arith.constant 0.000000e+00 : f32
      %12 = vector.broadcast %cst_8 : f32 to vector<8x128xf32>
      %c0_9 = arith.constant 0 : index
      %c0_10 = arith.constant 0 : index
      %13 = vector.load %arg4[%c0_9, %c0_10] : memref<8x128xf32, #tpu.memory_space<vmem>>, vector<8x128xf32>
      tpu.vector_store %arg4[%c0_9, %c0_10], %12 {strides = array<i32>} : memref<8x128xf32, #tpu.memory_space<vmem>>, vector<8x128xf32>,
    } else {
    }
    %c0 = arith.constant 0 : index
    %c0_1 = arith.constant 0 : index
    %3 = vector.load %arg2[%c0, %c0_1] : memref<384x128xf32, #tpu.memory_space<vmem>>, vector<384x128xf32>
    %c0_2 = arith.constant 0 : index
    %c0_3 = arith.constant 0 : index
    %4 = vector.load %arg3[%c0_2, %c0_3] : memref<384x128xf32, #tpu.memory_space<vmem>>, vector<384x128xf32>
    %5 = arith.subf %3, %4 : vector<384x128xf32>
    %6 = math.absf %5 : vector<384x128xf32>
    %c0_4 = arith.constant 0 : index
    %c0_5 = arith.constant 0 : index
    %7 = vector.load %arg4[%c0_4, %c0_5] : memref<8x128xf32, #tpu.memory_space<vmem>>, vector<8x128xf32>
    %8 = vector.shape_cast %6 : vector<384x128xf32> to vector<48x8x128xf32>
    %cst = arith.constant dense<0.000000e+00> : vector<8x128xf32>
    %9 = vector.multi_reduction <add>, %8, %cst [0] : vector<48x8x128xf32> to vector<8x128xf32>
    %10 = arith.addf %7, %9 : vector<8x128xf32>
    %c0_6 = arith.constant 0 : index
    %c0_7 = arith.constant 0 : index
    %11 = vector.load %arg4[%c0_6, %c0_7] : memref<8x128xf32, #tpu.memory_space<vmem>>, vector<8x128xf32>
    tpu.vector_store %arg4[%c0_6, %c0_7], %10 {strides = array<i32>} : memref<8x128xf32, #tpu.memory_space<vmem>>, vector<8x128xf32>,
    return
  }
  func.func @transform_0(%arg0: i32, %arg1: i32) -> (i32, i32) {
    %c1_i32 = arith.constant 1 : i32
    %0 = arith.muli %arg0, %c1_i32 : i32
    %1 = arith.addi %0, %arg1 : i32
    %c0_i32 = arith.constant 0 : i32
    %c0_i32_0 = arith.constant 0 : i32
    return %1, %c0_i32 : i32, i32
  }
  func.func @transform_1(%arg0: i32, %arg1: i32) -> (i32, i32) {
    %c1_i32 = arith.constant 1 : i32
    %0 = arith.muli %arg0, %c1_i32 : i32
    %1 = arith.addi %0, %arg1 : i32
    %c0_i32 = arith.constant 0 : i32
    %c0_i32_0 = arith.constant 0 : i32
    return %1, %c0_i32 : i32, i32
  }
  func.func @transform_2(%arg0: i32, %arg1: i32) -> (i32, i32) {
    %c0_i32 = arith.constant 0 : i32
    %c0_i32_0 = arith.constant 0 : i32
    return %arg0, %c0_i32 : i32, i32
  }
}

</mosaic_0001>

<llo_original>
// kernel: l1_loss.1
$region0: #{l1_loss.1}
  #allocation0 [shape = 'u32[]', space=smem, size = 0x4, offset = 0x4, fixed_abs, tag = 'smem constant byte address 0x4 - core index']
  #allocation1 [shape = 'u32[72,128]{1,0:T(1,128)}', space=vmem, size = 0x9000, scoped, tag = 'internal scratch']
  %s0 = inlined_call_operand.hbm [shape: f32[768,128], index: 0, kind: input, shape index: {}]
  %s1 = inlined_call_operand.hbm [shape: f32[768,128], index: 1, kind: input, shape index: {}]
  %s2 = inlined_call_operand.vmem [shape: f32[16,128], index: 2, kind: output, shape index: {}]
  %s3 = sld [smem:[#allocation0]]
  $region53: #{l1_loss.1} parent=0
    _
  %s5 = ssub.s32 1, %s3
  %s6 = scalar_select 0, %s5, %s3
  $region1: #{l1_loss.1} parent=0
    #allocation2 [shape = 'u8[393216]{0}', space=vmem, size = 0x60000, scoped, tag = 'input window, operand 0']
    #allocation3 [shape = 's32[2]{0}', space=sflag, size = 0x8, scoped, tag = 'scoped memory for l1_loss.1']
    #allocation4 [shape = 'u8[393216]{0}', space=vmem, size = 0x60000, scoped, tag = 'input window, operand 1']
    #allocation5 [shape = 's32[2]{0}', space=sflag, size = 0x8, scoped, tag = 'scoped memory for l1_loss.1']
    %7 = vsyncpa [#allocation3], 0
    %s8 = scalar_lea.sflag [#allocation3], 1
    %9 = vsyncpa %s8, 0
    %10 = vsyncpa [#allocation5], 0
    %s11 = scalar_lea.sflag [#allocation5], 1
    %12 = vsyncpa %s11, 0
    loop: start=0, step=1, limit=4
    $region2: #{l1_loss.1} parent=1 // loop_pre_header
      _
    $region3: #{l1_loss.1} parent=1 // loop_header
      %s14 = sphi 0, %s18
      %p15 = scmp.ge.s32.totalorder %s14, 4
      %s21 = sphi 0, %s33
      %s22 = sphi 0, %s29
      %s23 = sphi 0, %s21
      %s24 = sphi 0, %s22
      %s25 = sphi 0, %s23
      %s26 = sphi 0, %s24
      %s38 = sphi 0, %s40
      %s41 = sphi 0, %s38
      %s42 = sphi 0, %s41
      %s58 = sphi 0, %s42
      %s66 = sphi 0, %s68
      %s69 = sphi 0, %s66
      %s70 = sphi 0, %s69
      %s86 = sphi 0, %s70
      %s92 = sphi 0, %s94
      %s95 = sphi 0, %s92
      %s96 = sphi 0, %s95
      %s112 = sphi 0, %s96
    $region4: #{l1_loss.1} parent=1 // loop_header_branch
      %17 = sbr.rel (%p15) target = $region8
    $region5: #{l1_loss.1} parent=1 // loop_body
      %s19 = ssub.s32 %s14, 1
      %s20 = ssub.s32 %s14, 2
      %s27 = sadd.s32 1, %s22
      %p28 = scmp.ge.s32.totalorder %s27, 1
      %s29 = scalar_select %p28, 0, %s27
      %s30 = sadd.s32 1, %s21
      %s31 = scalar_select %p28, %s30, %s21
      %p32 = scmp.ge.s32.totalorder %s31, 2
      %s33 = scalar_select %p32, 0, %s31
      %s34 = sadd.s32 %s21, %s22
      %s35 = sadd.s32 %s33, %s29
      %s36 = ssub.s32 %s34, %s35
      %p37 = scmp.eq.s32.totalorder %s36, 0
      %s39 = sadd.s32 %s38, 1
      %s40 = scalar_select %p37, %s38, %s39
      %p43 = pneg %p37
      %p44 = scmp.eq.s32.totalorder %s14, 1
      %p45 = por %p43, %p44
      %p46 = scmp.ne.s32.totalorder %s38, %s41
      %p47 = scmp.eq.s32.totalorder %s14, 0
      %p48 = por %p46, %p47
      %p49 = scmp.ne.s32.totalorder %s38, %s41
      %p50 = scmp.eq.s32.totalorder %s19, 1
      %p51 = por %p49, %p50
      %p52 = scmp.ne.s32.totalorder %s41, %s42
      %p53 = scmp.eq.s32.totalorder %s19, 0
      %p54 = por %p52, %p53
      %p55 = scmp.ne.s32.totalorder %s41, %s42
      %p56 = scmp.eq.s32.totalorder %s20, 1
      %p57 = por %p55, %p56
      %p59 = scmp.ne.s32.totalorder %s42, %s58
      %p60 = scmp.eq.s32.totalorder %s20, 0
      %p61 = por %p59, %p60
      %s62 = sadd.s32 %s21, %s22
      %s63 = sadd.s32 %s33, %s29
      %s64 = ssub.s32 %s62, %s63
      %p65 = scmp.eq.s32.totalorder %s64, 0
      %s67 = sadd.s32 %s66, 1
      %s68 = scalar_select %p65, %s66, %s67
      %p71 = pneg %p65
      %p72 = scmp.eq.s32.totalorder %s14, 1
      %p73 = por %p71, %p72
      %p74 = scmp.ne.s32.totalorder %s66, %s69
      %p75 = scmp.eq.s32.totalorder %s14, 0
      %p76 = por %p74, %p75
      %p77 = scmp.ne.s32.totalorder %s66, %s69
      %p78 = scmp.eq.s32.totalorder %s19, 1
      %p79 = por %p77, %p78
      %p80 = scmp.ne.s32.totalorder %s69, %s70
      %p81 = scmp.eq.s32.totalorder %s19, 0
      %p82 = por %p80, %p81
      %p83 = scmp.ne.s32.totalorder %s69, %s70
      %p84 = scmp.eq.s32.totalorder %s20, 1
      %p85 = por %p83, %p84
      %p87 = scmp.ne.s32.totalorder %s70, %s86
      %p88 = scmp.eq.s32.totalorder %s20, 0
      %p89 = por %p87, %p88
      %s90 = ssub.s32 %s21, %s33
      %p91 = scmp.eq.s32.totalorder %s90, 0
      %s93 = sadd.s32 %s92, 1
      %s94 = scalar_select %p91, %s92, %s93
      %p97 = pneg %p91
      %p98 = scmp.eq.s32.totalorder %s14, 1
      %p99 = por %p97, %p98
      %p100 = scmp.ne.s32.totalorder %s92, %s95
      %p101 = scmp.eq.s32.totalorder %s14, 0
      %p102 = por %p100, %p101
      %p103 = scmp.ne.s32.totalorder %s92, %s95
      %p104 = scmp.eq.s32.totalorder %s19, 1
      %p105 = por %p103, %p104
      %p106 = scmp.ne.s32.totalorder %s95, %s96
      %p107 = scmp.eq.s32.totalorder %s19, 0
      %p108 = por %p106, %p107
      %p109 = scmp.ne.s32.totalorder %s95, %s96
      %p110 = scmp.eq.s32.totalorder %s20, 1
      %p111 = por %p109, %p110
      %p113 = scmp.ne.s32.totalorder %s96, %s112
      %p114 = scmp.eq.s32.totalorder %s20, 0
      %p115 = por %p113, %p114
      %p116 = scmp.le.s32.totalorder 1, %s14
      %p117 = scmp.lt.s32.totalorder %s14, 3
      %p118 = pnand %p116, %p117
      %p119 = pneg %p118
      // Predicated region
      $region9: #{l1_loss.1} parent=5 // pred_check
        _
      $region10: #{l1_loss.1} parent=5 // pred_check_branch
        %121 = sbr.rel (%p118) target = $region12
      $region11: #{l1_loss.1} parent=5 // pred_region
        %s122 = ssub.s32 %s14, 1
      $region12: #{l1_loss.1} parent=5 // pred_fallthru
        _
      %p123 = scmp.lt.s32.totalorder %s14, 2
      // Predicated region
      $region13: #{l1_loss.1} parent=5 // pred_check
        %p124 = pneg %p123
      $region14: #{l1_loss.1} parent=5 // pred_check_branch
        %126 = sbr.rel (%p124) target = $region16
      $region15: #{l1_loss.1} parent=5 // pred_region
        // Predicated region
        $region17: #{l1_loss.1} parent=15 // pred_check
          %p127 = pneg %p48
        $region18: #{l1_loss.1} parent=15 // pred_check_branch
          %129 = sbr.rel (%p127) target = $region20
        $region19: #{l1_loss.1} parent=15 // pred_region
          %s130 = sand.u32 %s38, 1
          %s131 = scalar_lea.sflag [#allocation3], %s130
          %s132 = sand.u32 %s38, 1
          %s133 = smul.addr %s132, 384
          %s134 = scalar_lea.vmem [#allocation2], %s133
          %s135 = sadd.s32 %s21, %s22
          %s136 = smul.u32 48, %s135
          %138 = vsyncadd %s131, 0
          %s139 = smul.addr %s136, 8
          %s140 = scalar_lea.hbm %s0, %s139
          %s141 = sshll.u32 %s140, 4
          %s142 = int_to_ptr.hbm [resolvable:$true] %s141
          %s143 = sshll.u32 %s134, 4
          %s144 = int_to_ptr.vmem [resolvable:$true] %s143
          %149 = dma.hbm_to_vmem [thread:$0]  %s142, 6144, %s144, %s131, 128, 128, 8
        $region20: #{l1_loss.1} parent=15 // pred_fallthru
          _
        // Predicated region
        $region21: #{l1_loss.1} parent=15 // pred_check
          %p150 = pneg %p76
        $region22: #{l1_loss.1} parent=15 // pred_check_branch
          %152 = sbr.rel (%p150) target = $region24
        $region23: #{l1_loss.1} parent=15 // pred_region
          %s153 = sand.u32 %s66, 1
          %s154 = scalar_lea.sflag [#allocation5], %s153
          %s155 = sand.u32 %s66, 1
          %s156 = smul.addr %s155, 384
          %s157 = scalar_lea.vmem [#allocation4], %s156
          %s158 = sadd.s32 %s21, %s22
          %s159 = smul.u32 48, %s158
          %161 = vsyncadd %s154, 0
          %s162 = smul.addr %s159, 8
          %s163 = scalar_lea.hbm %s1, %s162
          %s164 = sshll.u32 %s163, 4
          %s165 = int_to_ptr.hbm [resolvable:$true] %s164
          %s166 = sshll.u32 %s157, 4
          %s167 = int_to_ptr.vmem [resolvable:$true] %s166
          %172 = dma.hbm_to_vmem [thread:$0]  %s165, 6144, %s167, %s154, 128, 128, 8
        $region24: #{l1_loss.1} parent=15 // pred_fallthru
          _
      $region16: #{l1_loss.1} parent=5 // pred_fallthru
        _
      %p173 = scmp.le.s32.totalorder 1, %s14
      %p174 = scmp.lt.s32.totalorder %s14, 3
      %p175 = pnand %p173, %p174
      %p176 = pneg %p175
      // Predicated region
      $region25: #{l1_loss.1} parent=5 // pred_check
        _
      $region26: #{l1_loss.1} parent=5 // pred_check_branch
        %178 = sbr.rel (%p175) target = $region28
      $region27: #{l1_loss.1} parent=5 // pred_region
        %s179 = ssub.s32 %s14, 1
        %s180 = sand.u32 %s41, 1
        %s181 = scalar_lea.sflag [#allocation3], %s180
        %s182 = sand.u32 %s41, 1
        %s183 = smul.addr %s182, 384
        %s184 = scalar_lea.vmem [#allocation2], %s183
        // Predicated region
        $region29: #{l1_loss.1} parent=27 // pred_check
          %p185 = pneg %p54
        $region30: #{l1_loss.1} parent=27 // pred_check_branch
          %187 = sbr.rel (%p185) target = $region32
        $region31: #{l1_loss.1} parent=27 // pred_region
          %189 = dma.done %s181, 6144
        $region32: #{l1_loss.1} parent=27 // pred_fallthru
          _
        %s190 = sand.u32 %s69, 1
        %s191 = scalar_lea.sflag [#allocation5], %s190
        %s192 = sand.u32 %s69, 1
        %s193 = smul.addr %s192, 384
        %s194 = scalar_lea.vmem [#allocation4], %s193
        // Predicated region
        $region33: #{l1_loss.1} parent=27 // pred_check
          %p195 = pneg %p82
        $region34: #{l1_loss.1} parent=27 // pred_check_branch
          %197 = sbr.rel (%p195) target = $region36
        $region35: #{l1_loss.1} parent=27 // pred_region
          %199 = dma.done %s191, 6144
        $region36: #{l1_loss.1} parent=27 // pred_fallthru
          _
        %s200 = sand.u32 %s41, 1
        %s201 = scalar_lea.sflag [#allocation3], %s200
        %s202 = sand.u32 %s41, 1
        %s203 = smul.addr %s202, 384
        %s204 = scalar_lea.vmem [#allocation2], %s203
        %p205 = pneg %p54
        %p206 = pneg %p51
        %s207 = sand.u32 %s69, 1
        %s208 = scalar_lea.sflag [#allocation5], %s207
        %s209 = sand.u32 %s69, 1
        %s210 = smul.addr %s209, 384
        %s211 = scalar_lea.vmem [#allocation4], %s210
        %p212 = pneg %p82
        %p213 = pneg %p79
        %p214 = pneg %p108
        %p215 = pneg %p105
        %p216 = scmp.lt.s32.totalorder %s23, 1
        %s217 = scalar_select %p216, %s23, 1
        %s218 = smul.addr %s217, 8
        %s219 = scalar_lea.vmem %s2, %s218
        %s220 = sadd.s32 %s23, %s24
        %s221 = smul.u32 48, %s220
        %s222 = sadd.s32 %s23, %s24
        %s223 = smul.u32 48, %s222
        %p224 = scmp.lt.s32.totalorder %s23, 1
        %s225 = scalar_select %p224, %s23, 1
        %s226 = smul.addr %s225, 8
        %s227 = scalar_lea.vmem %s2, %s226
        %p228 = scmp.eq.s32.totalorder %s24, 0
        // Predicated region
        $region37: #{l1_loss.1} parent=27 // pred_check
          %p229 = pneg %p228
        $region38: #{l1_loss.1} parent=27 // pred_check_branch
          %231 = sbr.rel (%p229) target = $region40
        $region39: #{l1_loss.1} parent=27 // pred_region
          %232 = vst [vmem:[%s227] sm:$0xff] 0.0
        $region40: #{l1_loss.1} parent=27 // pred_fallthru
          _
        %v233 = vld [vmem:[%s184] sm:$0xff]
        %v234 = vld [vmem:[%s184 + $0x8] sm:$0xff]
        %v235 = vld [vmem:[%s184 + $0x10] sm:$0xff]
        %v236 = vld [vmem:[%s184 + $0x18] sm:$0xff]
        %v237 = vld [vmem:[%s184 + $0x20] sm:$0xff]
        %v238 = vld [vmem:[%s184 + $0x28] sm:$0xff]
        %v239 = vld [vmem:[%s184 + $0x30] sm:$0xff]
        %v240 = vld [vmem:[%s184 + $0x38] sm:$0xff]
        %v241 = vld [vmem:[%s184 + $0x40] sm:$0xff]
        %v242 = vld [vmem:[%s184 + $0x48] sm:$0xff]
        %v243 = vld [vmem:[%s184 + $0x50] sm:$0xff]
        %v244 = vld [vmem:[%s184 + $0x58] sm:$0xff]
        %v245 = vld [vmem:[%s184 + $0x60] sm:$0xff]
        %v246 = vld [vmem:[%s184 + $0x68] sm:$0xff]
        %v247 = vld [vmem:[%s184 + $0x70] sm:$0xff]
        %v248 = vld [vmem:[%s184 + $0x78] sm:$0xff]
        %v249 = vld [vmem:[%s184 + $0x80] sm:$0xff]
        %v250 = vld [vmem:[%s184 + $0x88] sm:$0xff]
        %v251 = vld [vmem:[%s184 + $0x90] sm:$0xff]
        %v252 = vld [vmem:[%s184 + $0x98] sm:$0xff]
        %v253 = vld [vmem:[%s184 + $0xa0] sm:$0xff]
        %v254 = vld [vmem:[%s184 + $0xa8] sm:$0xff]
        %v255 = vld [vmem:[%s184 + $0xb0] sm:$0xff]
        %v256 = vld [vmem:[%s184 + $0xb8] sm:$0xff]
        %v257 = vld [vmem:[%s184 + $0xc0] sm:$0xff]
        %v258 = vld [vmem:[%s184 + $0xc8] sm:$0xff]
        %v259 = vld [vmem:[%s184 + $0xd0] sm:$0xff]
        %v260 = vld [vmem:[%s184 + $0xd8] sm:$0xff]
        %v261 = vld [vmem:[%s184 + $0xe0] sm:$0xff]
        %v262 = vld [vmem:[%s184 + $0xe8] sm:$0xff]
        %v263 = vld [vmem:[%s184 + $0xf0] sm:$0xff]
        %v264 = vld [vmem:[%s184 + $0xf8] sm:$0xff]
        %v265 = vld [vmem:[%s184 + $0x100] sm:$0xff]
        %v266 = vld [vmem:[%s184 + $0x108] sm:$0xff]
        %v267 = vld [vmem:[%s184 + $0x110] sm:$0xff]
        %v268 = vld [vmem:[%s184 + $0x118] sm:$0xff]
        %v269 = vld [vmem:[%s184 + $0x120] sm:$0xff]
        %v270 = vld [vmem:[%s184 + $0x128] sm:$0xff]
        %v271 = vld [vmem:[%s184 + $0x130] sm:$0xff]
        %v272 = vld [vmem:[%s184 + $0x138] sm:$0xff]
        %v273 = vld [vmem:[%s184 + $0x140] sm:$0xff]
        %v274 = vld [vmem:[%s184 + $0x148] sm:$0xff]
        %v275 = vld [vmem:[%s184 + $0x150] sm:$0xff]
        %v276 = vld [vmem:[%s184 + $0x158] sm:$0xff]
        %v277 = vld [vmem:[%s184 + $0x160] sm:$0xff]
        %v278 = vld [vmem:[%s184 + $0x168] sm:$0xff]
        %v279 = vld [vmem:[%s184 + $0x170] sm:$0xff]
        %v280 = vld [vmem:[%s184 + $0x178] sm:$0xff]
        %v281 = vld [vmem:[%s194] sm:$0xff]
        %v282 = vld [vmem:[%s194 + $0x8] sm:$0xff]
        %v283 = vld [vmem:[%s194 + $0x10] sm:$0xff]
        %v284 = vld [vmem:[%s194 + $0x18] sm:$0xff]
        %v285 = vld [vmem:[%s194 + $0x20] sm:$0xff]
        %v286 = vld [vmem:[%s194 + $0x28] sm:$0xff]
        %v287 = vld [vmem:[%s194 + $0x30] sm:$0xff]
        %v288 = vld [vmem:[%s194 + $0x38] sm:$0xff]
        %v289 = vld [vmem:[%s194 + $0x40] sm:$0xff]
        %v290 = vld [vmem:[%s194 + $0x48] sm:$0xff]
        %v291 = vld [vmem:[%s194 + $0x50] sm:$0xff]
        %v292 = vld [vmem:[%s194 + $0x58] sm:$0xff]
        %v293 = vld [vmem:[%s194 + $0x60] sm:$0xff]
        %v294 = vld [vmem:[%s194 + $0x68] sm:$0xff]
        %v295 = vld [vmem:[%s194 + $0x70] sm:$0xff]
        %v296 = vld [vmem:[%s194 + $0x78] sm:$0xff]
        %v297 = vld [vmem:[%s194 + $0x80] sm:$0xff]
        %v298 = vld [vmem:[%s194 + $0x88] sm:$0xff]
        %v299 = vld [vmem:[%s194 + $0x90] sm:$0xff]
        %v300 = vld [vmem:[%s194 + $0x98] sm:$0xff]
        %v301 = vld [vmem:[%s194 + $0xa0] sm:$0xff]
        %v302 = vld [vmem:[%s194 + $0xa8] sm:$0xff]
        %v303 = vld [vmem:[%s194 + $0xb0] sm:$0xff]
        %v304 = vld [vmem:[%s194 + $0xb8] sm:$0xff]
        %v305 = vld [vmem:[%s194 + $0xc0] sm:$0xff]
        %v306 = vld [vmem:[%s194 + $0xc8] sm:$0xff]
        %v307 = vld [vmem:[%s194 + $0xd0] sm:$0xff]
        %v308 = vld [vmem:[%s194 + $0xd8] sm:$0xff]
        %v309 = vld [vmem:[%s194 + $0xe0] sm:$0xff]
        %v310 = vld [vmem:[%s194 + $0xe8] sm:$0xff]
        %v311 = vld [vmem:[%s194 + $0xf0] sm:$0xff]
        %v312 = vld [vmem:[%s194 + $0xf8] sm:$0xff]
        %v313 = vld [vmem:[%s194 + $0x100] sm:$0xff]
        %v314 = vld [vmem:[%s194 + $0x108] sm:$0xff]
        %v315 = vld [vmem:[%s194 + $0x110] sm:$0xff]
        %v316 = vld [vmem:[%s194 + $0x118] sm:$0xff]
        %v317 = vld [vmem:[%s194 + $0x120] sm:$0xff]
        %v318 = vld [vmem:[%s194 + $0x128] sm:$0xff]
        %v319 = vld [vmem:[%s194 + $0x130] sm:$0xff]
        %v320 = vld [vmem:[%s194 + $0x138] sm:$0xff]
        %v321 = vld [vmem:[%s194 + $0x140] sm:$0xff]
        %v322 = vld [vmem:[%s194 + $0x148] sm:$0xff]
        %v323 = vld [vmem:[%s194 + $0x150] sm:$0xff]
        %v324 = vld [vmem:[%s194 + $0x158] sm:$0xff]
        %v325 = vld [vmem:[%s194 + $0x160] sm:$0xff]
        %v326 = vld [vmem:[%s194 + $0x168] sm:$0xff]
        %v327 = vld [vmem:[%s194 + $0x170] sm:$0xff]
        %v328 = vld [vmem:[%s194 + $0x178] sm:$0xff]
        %v329 = vsub.f32 %v233, %v281
        %v330 = vsub.f32 %v234, %v282
        %v331 = vsub.f32 %v235, %v283
        %v332 = vsub.f32 %v236, %v284
        %v333 = vsub.f32 %v237, %v285
        %v334 = vsub.f32 %v238, %v286
        %v335 = vsub.f32 %v239, %v287
        %v336 = vsub.f32 %v240, %v288
        %v337 = vsub.f32 %v241, %v289
        %v338 = vsub.f32 %v242, %v290
        %v339 = vsub.f32 %v243, %v291
        %v340 = vsub.f32 %v244, %v292
        %v341 = vsub.f32 %v245, %v293
        %v342 = vsub.f32 %v246, %v294
        %v343 = vsub.f32 %v247, %v295
        %v344 = vsub.f32 %v248, %v296
        %v345 = vsub.f32 %v249, %v297
        %v346 = vsub.f32 %v250, %v298
        %v347 = vsub.f32 %v251, %v299
        %v348 = vsub.f32 %v252, %v300
        %v349 = vsub.f32 %v253, %v301
        %v350 = vsub.f32 %v254, %v302
        %v351 = vsub.f32 %v255, %v303
        %v352 = vsub.f32 %v256, %v304
        %v353 = vsub.f32 %v257, %v305
        %v354 = vsub.f32 %v258, %v306
        %v355 = vsub.f32 %v259, %v307
        %v356 = vsub.f32 %v260, %v308
        %v357 = vsub.f32 %v261, %v309
        %v358 = vsub.f32 %v262, %v310
        %v359 = vsub.f32 %v263, %v311
        %v360 = vsub.f32 %v264, %v312
        %v361 = vsub.f32 %v265, %v313
        %v362 = vsub.f32 %v266, %v314
        %v363 = vsub.f32 %v267, %v315
        %v364 = vsub.f32 %v268, %v316
        %v365 = vsub.f32 %v269, %v317
        %v366 = vsub.f32 %v270, %v318
        %v367 = vsub.f32 %v271, %v319
        %v368 = vsub.f32 %v272, %v320
        %v369 = vsub.f32 %v273, %v321
        %v370 = vsub.f32 %v274, %v322
        %v371 = vsub.f32 %v275, %v323
        %v372 = vsub.f32 %v276, %v324
        %v373 = vsub.f32 %v277, %v325
        %v374 = vsub.f32 %v278, %v326
        %v375 = vsub.f32 %v279, %v327
        %v376 = vsub.f32 %v280, %v328
        %v377 = vand.u32 2147483647, %v329
        %v378 = vand.u32 2147483647, %v330
        %v379 = vand.u32 2147483647, %v331
        %v380 = vand.u32 2147483647, %v332
        %v381 = vand.u32 2147483647, %v333
        %v382 = vand.u32 2147483647, %v334
        %v383 = vand.u32 2147483647, %v335
        %v384 = vand.u32 2147483647, %v336
        %v385 = vand.u32 2147483647, %v337
        %v386 = vand.u32 2147483647, %v338
        %v387 = vand.u32 2147483647, %v339
        %v388 = vand.u32 2147483647, %v340
        %v389 = vand.u32 2147483647, %v341
        %v390 = vand.u32 2147483647, %v342
        %v391 = vand.u32 2147483647, %v343
        %v392 = vand.u32 2147483647, %v344
        %v393 = vand.u32 2147483647, %v345
        %v394 = vand.u32 2147483647, %v346
        %v395 = vand.u32 2147483647, %v347
        %v396 = vand.u32 2147483647, %v348
        %v397 = vand.u32 2147483647, %v349
        %v398 = vand.u32 2147483647, %v350
        %v399 = vand.u32 2147483647, %v351
        %v400 = vand.u32 2147483647, %v352
        %v401 = vand.u32 2147483647, %v353
        %v402 = vand.u32 2147483647, %v354
        %v403 = vand.u32 2147483647, %v355
        %v404 = vand.u32 2147483647, %v356
        %v405 = vand.u32 2147483647, %v357
        %v406 = vand.u32 2147483647, %v358
        %v407 = vand.u32 2147483647, %v359
        %v408 = vand.u32 2147483647, %v360
        %v409 = vand.u32 2147483647, %v361
        %v410 = vand.u32 2147483647, %v362
        %v411 = vand.u32 2147483647, %v363
        %v412 = vand.u32 2147483647, %v364
        %v413 = vand.u32 2147483647, %v365
        %v414 = vand.u32 2147483647, %v366
        %v415 = vand.u32 2147483647, %v367
        %v416 = vand.u32 2147483647, %v368
        %v417 = vand.u32 2147483647, %v369
        %v418 = vand.u32 2147483647, %v370
        %v419 = vand.u32 2147483647, %v371
        %v420 = vand.u32 2147483647, %v372
        %v421 = vand.u32 2147483647, %v373
        %v422 = vand.u32 2147483647, %v374
        %v423 = vand.u32 2147483647, %v375
        %v424 = vand.u32 2147483647, %v376
        %v425 = vld [vmem:[%s227] sm:$0xff]
        %v426 = vadd.f32 %v377, %v378
        %v427 = vadd.f32 %v426, %v379
        %v428 = vadd.f32 %v427, %v380
        %v429 = vadd.f32 %v428, %v381
        %v430 = vadd.f32 %v429, %v382
        %v431 = vadd.f32 %v430, %v383
        %v432 = vadd.f32 %v431, %v384
        %v433 = vadd.f32 %v432, %v385
        %v434 = vadd.f32 %v433, %v386
        %v435 = vadd.f32 %v434, %v387
        %v436 = vadd.f32 %v435, %v388
        %v437 = vadd.f32 %v436, %v389
        %v438 = vadd.f32 %v437, %v390
        %v439 = vadd.f32 %v438, %v391
        %v440 = vadd.f32 %v439, %v392
        %v441 = vadd.f32 %v440, %v393
        %v442 = vadd.f32 %v441, %v394
        %v443 = vadd.f32 %v442, %v395
        %v444 = vadd.f32 %v443, %v396
        %v445 = vadd.f32 %v444, %v397
        %v446 = vadd.f32 %v445, %v398
        %v447 = vadd.f32 %v446, %v399
        %v448 = vadd.f32 %v447, %v400
        %v449 = vadd.f32 %v448, %v401
        %v450 = vadd.f32 %v449, %v402
        %v451 = vadd.f32 %v450, %v403
        %v452 = vadd.f32 %v451, %v404
        %v453 = vadd.f32 %v452, %v405
        %v454 = vadd.f32 %v453, %v406
        %v455 = vadd.f32 %v454, %v407
        %v456 = vadd.f32 %v455, %v408
        %v457 = vadd.f32 %v456, %v409
        %v458 = vadd.f32 %v457, %v410
        %v459 = vadd.f32 %v458, %v411
        %v460 = vadd.f32 %v459, %v412
        %v461 = vadd.f32 %v460, %v413
        %v462 = vadd.f32 %v461, %v414
        %v463 = vadd.f32 %v462, %v415
        %v464 = vadd.f32 %v463, %v416
        %v465 = vadd.f32 %v464, %v417
        %v466 = vadd.f32 %v465, %v418
        %v467 = vadd.f32 %v466, %v419
        %v468 = vadd.f32 %v467, %v420
        %v469 = vadd.f32 %v468, %v421
        %v470 = vadd.f32 %v469, %v422
        %v471 = vadd.f32 %v470, %v423
        %v472 = vadd.f32 %v471, %v424
        %v473 = vadd.f32 %v425, %v472
        %474 = vst [vmem:[%s227] sm:$0xff] %v473
        %p475 = scmp.lt.s32.totalorder %s23, 1
        %s476 = scalar_select %p475, %s23, 1
        %s477 = smul.addr %s476, 8
        %s478 = scalar_lea.vmem %s2, %s477
        // Predicated region
        $region41: #{l1_loss.1} parent=27 // pred_check
          %p479 = pneg %p105
        $region42: #{l1_loss.1} parent=27 // pred_check_branch
          %481 = sbr.rel (%p479) target = $region44
        $region43: #{l1_loss.1} parent=27 // pred_region
          _
        $region44: #{l1_loss.1} parent=27 // pred_fallthru
          _
      $region28: #{l1_loss.1} parent=5 // pred_fallthru
        _
      %p482 = scmp.le.s32.totalorder 2, %s14
      // Predicated region
      $region45: #{l1_loss.1} parent=5 // pred_check
        %p483 = pneg %p482
      $region46: #{l1_loss.1} parent=5 // pred_check_branch
        %485 = sbr.rel (%p483) target = $region48
      $region47: #{l1_loss.1} parent=5 // pred_region
        %s486 = ssub.s32 %s14, 2
        // Predicated region
        $region49: #{l1_loss.1} parent=47 // pred_check
          %p487 = pneg %p111
        $region50: #{l1_loss.1} parent=47 // pred_check_branch
          %489 = sbr.rel (%p487) target = $region52
        $region51: #{l1_loss.1} parent=47 // pred_region
          %p490 = scmp.lt.s32.totalorder %s25, 1
          %s491 = scalar_select %p490, %s25, 1
          %s492 = smul.addr %s491, 8
          %s493 = scalar_lea.vmem %s2, %s492
        $region52: #{l1_loss.1} parent=47 // pred_fallthru
          _
      $region48: #{l1_loss.1} parent=5 // pred_fallthru
        _
    $region6: #{l1_loss.1} parent=1 // loop_footer
      %s18 = sadd.s32 1, %s14
    $region7: #{l1_loss.1} parent=1 // loop_footer_branch
      %13 = sbr.rel target = $region3
    $region8: #{l1_loss.1} parent=1 // loop_exit
      _
    %494 = vsyncpa [#allocation3], 1
    %s495 = scalar_lea.sflag [#allocation3], 1
    %496 = vsyncpa %s495, 1
    %497 = vsyncpa [#allocation5], 1
    %s498 = scalar_lea.sflag [#allocation5], 1
    %499 = vsyncpa %s498, 1

</llo_original>
